<compile_context>
chip_gen: v7x
topology: tpu7x:2x2x1
jax: 0.10.0
libtpu: 0.0.40
codegen_flags: <defaults>
</compile_context>

<pallas_src>
import functools
import math

import jax
import jax.numpy as jnp
from jax.experimental import pallas as pl
from jax.experimental.pallas import tpu as pltpu


def _rbf_kernel(d_ref, c_ref, o_ref, *, sqrt_gamma: float):
    # d_ref: (tile_b, tile_l, 1)      f32 distances (one per output row)
    # c_ref: (1, 1, n_rbf)            f32 centers, pre-scaled by sqrt(gamma)
    # o_ref: (tile_b, tile_l, n_rbf)  output block, already in its final layout
    x = d_ref[...] * sqrt_gamma            # scale the narrow input once per block
    diff = x - c_ref[...]                  # broadcast -> (tile_b, tile_l, n_rbf)
    o_ref[...] = jnp.exp(-(diff * diff)).astype(o_ref.dtype)


def _choose_tiles(b: int, l: int, n_rbf: int, out_itemsize: int):
    """Pick (tile_b, tile_l): ~1 MiB useful output/block, >= 4 pipelined steps."""
    sub = 16                                           # sublane granularity (f32 & bf16 safe)
    target = max(sub, ((1 << 20) // (n_rbf * out_itemsize)) // sub * sub)
    if l >= target:
        tile_l, tile_b = target, 1
    else:
        tile_l = l                                     # full last dim -> always legal
        tile_b = min(b, max(1, target // l))

    def steps(tb, tl):
        return (-(-b // tb)) * (-(-l // tl))

    # Keep >= 4 near-equal grid steps when possible: v7x gets >= 2 overlapped
    # steps per TensorCore; v5e/v6e hide writeback of step i under step i+1.
    while steps(tile_b, tile_l) < 4:
        if tile_b > 1:
            tile_b = -(-tile_b // 2)
        elif tile_l > sub:
            half = -(-tile_l // 2)
            tile_l = max(sub, (-(-half // sub)) * sub)
        else:
            break
    return tile_b, tile_l


def radial_basis_functions(r_distances: jax.Array,
                           centers: jax.Array,
                           gamma,
                           *,
                           out_dtype=jnp.float32) -> jax.Array:
    """Pallas equivalent of RadialBasisFunctions.forward.

    r_distances: any shape (...,), float32
    centers:     (1, n_rbf), float32
    returns:     (..., n_rbf) in `out_dtype` (float32 matches the torch module;
                 bfloat16 halves HBM write bytes for bf16 consumers).
    """
    orig_shape = r_distances.shape
    n_rbf = int(centers.shape[-1])

    r = jnp.asarray(r_distances, jnp.float32)
    if r.ndim == 0:
        r = r.reshape(1)
    l = int(r.shape[-1])
    b = int(r.size // l)

    out_itemsize = jnp.dtype(out_dtype).itemsize
    tile_b, tile_l = _choose_tiles(b, l, n_rbf, out_itemsize)
    grid = (pl.cdiv(b, tile_b), pl.cdiv(l, tile_l))

    # Fold gamma: exp(-g*(d-c)^2) == exp(-(sqrt(g)*d - sqrt(g)*c)^2).
    sqrt_gamma = math.sqrt(float(gamma))
    d3 = r.reshape(b, l, 1)                            # tiny input-side relayout (n floats)
    c3 = (sqrt_gamma * centers.reshape(1, 1, n_rbf)).astype(jnp.float32)

    # VMEM budget: both the output block and the narrow (.., 1) input block pad
    # their minor dim to 128 lanes; double-buffered by the pipeline.
    lane_pad = (-(-n_rbf // 128)) * 128
    sub_l = (-(-tile_l // 8)) * 8
    out_blk = tile_b * sub_l * lane_pad * out_itemsize
    in_blk = tile_b * sub_l * 128 * 4
    vmem_limit = int(min(32 << 20, 2 * (out_blk + in_blk) + (10 << 20)))

    n_total = b * l
    cost = pl.CostEstimate(
        flops=3 * n_total * n_rbf,
        transcendentals=n_total * n_rbf,
        bytes_accessed=4 * n_total + out_itemsize * n_total * n_rbf + 4 * n_rbf,
    )

    out = pl.pallas_call(
        functools.partial(_rbf_kernel, sqrt_gamma=sqrt_gamma),
        out_shape=jax.ShapeDtypeStruct((b, l, n_rbf), out_dtype),
        grid_spec=pltpu.PrefetchScalarGridSpec(
            num_scalar_prefetch=0,
            grid=grid,
            in_specs=[
                pl.BlockSpec((tile_b, tile_l, 1), lambda ib, il: (ib, il, 0)),
                pl.BlockSpec((1, 1, n_rbf), lambda ib, il: (0, 0, 0)),  # resident
            ],
            out_specs=pl.BlockSpec((tile_b, tile_l, n_rbf),
                                   lambda ib, il: (ib, il, 0)),
        ),
        compiler_params=pltpu.CompilerParams(
            dimension_semantics=("parallel", "parallel"),
            vmem_limit_bytes=vmem_limit),
        cost_estimate=cost,
    )(d3, c3)

    # Only splits the flattened major dim back out -> layout-preserving (free).
    return out.reshape(*orig_shape, n_rbf)


if __name__ == "__main__":
    # Module hyperparameters (deterministic, in-script).
    rbf_min, rbf_max, n_rbf, gamma = 0.0, 5.0, 64, 10.0
    centers = jnp.linspace(rbf_min, rbf_max, n_rbf,
                           dtype=jnp.float32).reshape(1, -1)

    key = jax.random.PRNGKey(0)
    k0, k1, k2 = jax.random.split(key, 3)

    def ref_fn(r):
        return jnp.exp(-gamma * (r[..., None] - centers) ** 2)

    # 1) Batch of pairwise distances (2, 100): exercises ragged L blocks.
    r1 = jax.random.uniform(k0, (2, 100), jnp.float32, rbf_min, rbf_max)
    o1 = jax.block_until_ready(radial_basis_functions(r1, centers, gamma))
    assert o1.shape == (2, 100, n_rbf), o1.shape
    assert jnp.allclose(o1, ref_fn(r1), atol=1e-5, rtol=1e-5)

    # 2) Small odd shape (3, 7): full-L blocks, batch-tiled grid.
    r2 = jax.random.uniform(k1, (3, 7), jnp.float32, rbf_min, rbf_max)
    o2 = jax.block_until_ready(radial_basis_functions(r2, centers, gamma))
    assert o2.shape == (3, 7, n_rbf), o2.shape
    assert jnp.allclose(o2, ref_fn(r2), atol=1e-5, rtol=1e-5)

    # 3) Rank-1 input (37,): flat path + ragged last block.
    r3 = jax.random.uniform(k2, (37,), jnp.float32, rbf_min, rbf_max)
    o3 = jax.block_until_ready(radial_basis_functions(r3, centers, gamma))
    assert o3.shape == (37, n_rbf), o3.shape
    assert jnp.allclose(o3, ref_fn(r3), atol=1e-5, rtol=1e-5)

    # 4) Optional bf16 output (halves HBM write bytes for bf16 consumers).
    o4 = jax.block_until_ready(
        radial_basis_functions(r1, centers, gamma, out_dtype=jnp.bfloat16))
    assert o4.dtype == jnp.bfloat16 and o4.shape == (2, 100, n_rbf)
    assert jnp.allclose(o4.astype(jnp.float32), ref_fn(r1), atol=1e-2, rtol=2e-2)

    print("KERNEL_OK")
</pallas_src>

<mosaic_0001>
module attributes {stable_mosaic.version = 11 : i64} {
  func.func @_rbf_kernel(%arg0: i32, %arg1: i32, %arg2: memref<1x64x1xf32, #tpu.memory_space<vmem>>, %arg3: memref<1x1x64xf32, #tpu.memory_space<vmem>>, %arg4: memref<1x64x64xf32, #tpu.memory_space<vmem>>) attributes {dimension_semantics = [#tpu.dimension_semantics<parallel>, #tpu.dimension_semantics<parallel>], iteration_bounds = array<i64: 2, 2>, scalar_prefetch = 0 : i64, scratch_operands = 0 : i64, tpu.core_type = #tpu.core_type<tc>, window_params = [{transform_indices = @transform_0, window_bounds = array<i64: 1, 64, 1>}, {pipeline_mode = #tpu.pipeline_mode<synchronous>, transform_indices = @transform_1, window_bounds = array<i64: 1, 1, 64>}, {transform_indices = @transform_2, window_bounds = array<i64: 1, 64, 64>}]} {
    %c0 = arith.constant 0 : index
    %c0_0 = arith.constant 0 : index
    %c0_1 = arith.constant 0 : index
    %0 = vector.load %arg2[%c0, %c0_0, %c0_1] : memref<1x64x1xf32, #tpu.memory_space<vmem>>, vector<1x64x1xf32>
    %cst = arith.constant 3.1622777 : f32
    %1 = vector.broadcast %cst : f32 to vector<1x64x1xf32>
    %2 = arith.mulf %0, %1 : vector<1x64x1xf32>
    %c0_2 = arith.constant 0 : index
    %c0_3 = arith.constant 0 : index
    %c0_4 = arith.constant 0 : index
    %3 = vector.load %arg3[%c0_2, %c0_3, %c0_4] : memref<1x1x64xf32, #tpu.memory_space<vmem>>, vector<1x1x64xf32>
    %4 = vector.broadcast %2 : vector<1x64x1xf32> to vector<1x64x64xf32>
    %5 = vector.broadcast %3 : vector<1x1x64xf32> to vector<1x64x64xf32>
    %6 = arith.subf %4, %5 : vector<1x64x64xf32>
    %7 = arith.mulf %6, %6 : vector<1x64x64xf32>
    %cst_5 = arith.constant 0.000000e+00 : f32
    %8 = vector.broadcast %cst_5 : f32 to vector<1x64x64xf32>
    %9 = arith.subf %8, %7 : vector<1x64x64xf32>
    %10 = math.exp %9 : vector<1x64x64xf32>
    %c0_6 = arith.constant 0 : index
    %c0_7 = arith.constant 0 : index
    %c0_8 = arith.constant 0 : index
    %11 = vector.load %arg4[%c0_6, %c0_7, %c0_8] : memref<1x64x64xf32, #tpu.memory_space<vmem>>, vector<1x64x64xf32>
    tpu.vector_store %arg4[%c0_6, %c0_7, %c0_8], %10 {strides = array<i32>} : memref<1x64x64xf32, #tpu.memory_space<vmem>>, vector<1x64x64xf32>,
    return
  }
  func.func @transform_0(%arg0: i32, %arg1: i32) -> (i32, i32, i32) {
    %c0_i32 = arith.constant 0 : i32
    %c0_i32_0 = arith.constant 0 : i32
    return %arg0, %arg1, %c0_i32 : i32, i32, i32
  }
  func.func @transform_1(%arg0: i32, %arg1: i32) -> (i32, i32, i32) {
    %c0_i32 = arith.constant 0 : i32
    %c0_i32_0 = arith.constant 0 : i32
    %c0_i32_1 = arith.constant 0 : i32
    %c0_i32_2 = arith.constant 0 : i32
    return %c0_i32, %c0_i32_0, %c0_i32_1 : i32, i32, i32
  }
  func.func @transform_2(%arg0: i32, %arg1: i32) -> (i32, i32, i32) {
    %c0_i32 = arith.constant 0 : i32
    %c0_i32_0 = arith.constant 0 : i32
    return %arg0, %arg1, %c0_i32 : i32, i32, i32
  }
}

</mosaic_0001>

<llo_original>
// kernel: tpu_custom_call.1
$region0: #{tpu_custom_call.1}
  #allocation0 [shape = 'u32[]', space=smem, size = 0x4, offset = 0x4, fixed_abs, tag = 'smem constant byte address 0x4 - core index']
  #allocation1 [shape = 'u32[144,128]{1,0:T(1,128)}', space=vmem, size = 0x12000, scoped, tag = 'internal scratch']
  %s0 = inlined_call_operand.vmem [shape: f32[2,100,1], index: 0, kind: input, shape index: {}]
  %s1 = inlined_call_operand.vmem [shape: f32[1,1,64], index: 1, kind: input, shape index: {}]
  %s2 = inlined_call_operand.vmem [shape: f32[2,100,64], index: 2, kind: output, shape index: {}]
  %s3 = sld [smem:[#allocation0]]
  $region89: #{tpu_custom_call.1} parent=0
    _
  %s5 = ssub.s32 1, %s3
  %s6 = scalar_select 0, %s5, %s3
  $region1: #{tpu_custom_call.1} parent=0
    #allocation2 [shape = 'u8[65536]{0}', space=vmem, size = 0x10000, scoped, tag = 'output window, operand 0']
    loop: start=0, step=1, limit=6
    $region2: #{tpu_custom_call.1} parent=1 // loop_pre_header
      _
    $region3: #{tpu_custom_call.1} parent=1 // loop_header
      %s8 = sphi 0, %s12
      %p9 = scmp.ge.s32.totalorder %s8, 6
      %s15 = sphi 0, %s27
      %s16 = sphi 0, %s23
      %s17 = sphi 0, %s15
      %s18 = sphi 0, %s16
      %s19 = sphi 0, %s17
      %s20 = sphi 0, %s18
      %s32 = sphi 0, %s34
      %s35 = sphi 0, %s32
      %s36 = sphi 0, %s35
      %s52 = sphi 0, %s36
      %s56 = sphi 0, %s56
      %s58 = sphi 0, %s56
      %s59 = sphi 0, %s58
      %s73 = sphi 0, %s59
      %s81 = sphi 0, %s83
      %s84 = sphi 0, %s81
      %s85 = sphi 0, %s84
      %s101 = sphi 0, %s85
    $region4: #{tpu_custom_call.1} parent=1 // loop_header_branch
      %11 = sbr.rel (%p9) target = $region8
    $region5: #{tpu_custom_call.1} parent=1 // loop_body
      %s13 = ssub.s32 %s8, 1
      %s14 = ssub.s32 %s8, 2
      %s21 = sadd.s32 1, %s16
      %p22 = scmp.ge.s32.totalorder %s21, 2
      %s23 = scalar_select %p22, 0, %s21
      %s24 = sadd.s32 1, %s15
      %s25 = scalar_select %p22, %s24, %s15
      %p26 = scmp.ge.s32.totalorder %s25, 2
      %s27 = scalar_select %p26, 0, %s25
      %s28 = ssub.s32 %s15, %s27
      %s29 = ssub.s32 %s16, %s23
      %s30 = sor.u32 %s28, %s29
      %p31 = scmp.eq.s32.totalorder %s30, 0
      %s33 = sadd.s32 %s32, 1
      %s34 = scalar_select %p31, %s32, %s33
      %p37 = pneg %p31
      %p38 = scmp.eq.s32.totalorder %s8, 3
      %p39 = por %p37, %p38
      %p40 = scmp.ne.s32.totalorder %s32, %s35
      %p41 = scmp.eq.s32.totalorder %s8, 0
      %p42 = por %p40, %p41
      %p43 = scmp.ne.s32.totalorder %s32, %s35
      %p44 = scmp.eq.s32.totalorder %s13, 3
      %p45 = por %p43, %p44
      %p46 = scmp.ne.s32.totalorder %s35, %s36
      %p47 = scmp.eq.s32.totalorder %s13, 0
      %p48 = por %p46, %p47
      %p49 = scmp.ne.s32.totalorder %s35, %s36
      %p50 = scmp.eq.s32.totalorder %s14, 3
      %p51 = por %p49, %p50
      %p53 = scmp.ne.s32.totalorder %s36, %s52
      %p54 = scmp.eq.s32.totalorder %s14, 0
      %p55 = por %p53, %p54
      %s57 = sadd.s32 %s56, 1
      %p60 = scmp.eq.s32.totalorder %s8, 3
      %p61 = scmp.ne.s32.totalorder %s56, %s58
      %p62 = scmp.eq.s32.totalorder %s8, 0
      %p63 = por %p61, %p62
      %p64 = scmp.ne.s32.totalorder %s56, %s58
      %p65 = scmp.eq.s32.totalorder %s13, 3
      %p66 = por %p64, %p65
      %p67 = scmp.ne.s32.totalorder %s58, %s59
      %p68 = scmp.eq.s32.totalorder %s13, 0
      %p69 = por %p67, %p68
      %p70 = scmp.ne.s32.totalorder %s58, %s59
      %p71 = scmp.eq.s32.totalorder %s14, 3
      %p72 = por %p70, %p71
      %p74 = scmp.ne.s32.totalorder %s59, %s73
      %p75 = scmp.eq.s32.totalorder %s14, 0
      %p76 = por %p74, %p75
      %s77 = ssub.s32 %s15, %s27
      %s78 = ssub.s32 %s16, %s23
      %s79 = sor.u32 %s77, %s78
      %p80 = scmp.eq.s32.totalorder %s79, 0
      %s82 = sadd.s32 %s81, 1
      %s83 = scalar_select %p80, %s81, %s82
      %p86 = pneg %p80
      %p87 = scmp.eq.s32.totalorder %s8, 3
      %p88 = por %p86, %p87
      %p89 = scmp.ne.s32.totalorder %s81, %s84
      %p90 = scmp.eq.s32.totalorder %s8, 0
      %p91 = por %p89, %p90
      %p92 = scmp.ne.s32.totalorder %s81, %s84
      %p93 = scmp.eq.s32.totalorder %s13, 3
      %p94 = por %p92, %p93
      %p95 = scmp.ne.s32.totalorder %s84, %s85
      %p96 = scmp.eq.s32.totalorder %s13, 0
      %p97 = por %p95, %p96
      %p98 = scmp.ne.s32.totalorder %s84, %s85
      %p99 = scmp.eq.s32.totalorder %s14, 3
      %p100 = por %p98, %p99
      %p102 = scmp.ne.s32.totalorder %s85, %s101
      %p103 = scmp.eq.s32.totalorder %s14, 0
      %p104 = por %p102, %p103
      %p105 = scmp.le.s32.totalorder 1, %s8
      %p106 = scmp.lt.s32.totalorder %s8, 5
      %p107 = pnand %p105, %p106
      %p108 = pneg %p107
      // Predicated region
      $region9: #{tpu_custom_call.1} parent=5 // pred_check
        _
      $region10: #{tpu_custom_call.1} parent=5 // pred_check_branch
        %110 = sbr.rel (%p107) target = $region12
      $region11: #{tpu_custom_call.1} parent=5 // pred_region
        %s111 = ssub.s32 %s8, 1
        // Predicated region
        $region13: #{tpu_custom_call.1} parent=11 // pred_check
          %p112 = pneg %p69
        $region14: #{tpu_custom_call.1} parent=11 // pred_check_branch
          %114 = sbr.rel (%p112) target = $region16
        $region15: #{tpu_custom_call.1} parent=11 // pred_region
          _
        $region16: #{tpu_custom_call.1} parent=11 // pred_fallthru
          _
      $region12: #{tpu_custom_call.1} parent=5 // pred_fallthru
        _
      %p115 = scmp.lt.s32.totalorder %s8, 4
      // Predicated region
      $region17: #{tpu_custom_call.1} parent=5 // pred_check
        %p116 = pneg %p115
      $region18: #{tpu_custom_call.1} parent=5 // pred_check_branch
        %118 = sbr.rel (%p116) target = $region20
      $region19: #{tpu_custom_call.1} parent=5 // pred_region
        // Predicated region
        $region21: #{tpu_custom_call.1} parent=19 // pred_check
          %p119 = pneg %p42
        $region22: #{tpu_custom_call.1} parent=19 // pred_check_branch
          %121 = sbr.rel (%p119) target = $region24
        $region23: #{tpu_custom_call.1} parent=19 // pred_region
          %s122 = smul.u32 8, %s16
          %s123 = ssub.s32 13, %s122
          %p124 = scmp.lt.s32.totalorder %s123, 8
          %s125 = scalar_select %p124, %s123, 8
          %s126 = smul.u32 128, %s125
          %p127 = scmp.lt.s32.totalorder %s15, 1
          %s128 = scalar_select %p127, %s15, 1
          %p129 = scmp.lt.s32.totalorder %s122, 12
          %s130 = scalar_select %p129, %s122, 12
          %s131 = smul.addr %s128, 13
          %s132 = sadd.s32 %s130, %s131
          %s133 = smul.addr %s132, 8
          %s134 = scalar_lea.vmem %s0, %s133
          %s135 = smul.u32 8, %s16
          %s136 = ssub.s32 13, %s135
          %p137 = scmp.lt.s32.totalorder %s136, 8
          %s138 = scalar_select %p137, %s136, 8
          %s139 = smul.u32 128, %s138
        $region24: #{tpu_custom_call.1} parent=19 // pred_fallthru
          _
      $region20: #{tpu_custom_call.1} parent=5 // pred_fallthru
        _
      %p140 = scmp.le.s32.totalorder 1, %s8
      %p141 = scmp.lt.s32.totalorder %s8, 5
      %p142 = pnand %p140, %p141
      %p143 = pneg %p142
      // Predicated region
      $region25: #{tpu_custom_call.1} parent=5 // pred_check
        _
      $region26: #{tpu_custom_call.1} parent=5 // pred_check_branch
        %145 = sbr.rel (%p142) target = $region28
      $region27: #{tpu_custom_call.1} parent=5 // pred_region
        %s146 = ssub.s32 %s8, 1
        %s147 = smul.u32 8, %s18
        %s148 = ssub.s32 13, %s147
        %p149 = scmp.lt.s32.totalorder %s148, 8
        %s150 = scalar_select %p149, %s148, 8
        %s151 = smul.u32 128, %s150
        %p152 = scmp.lt.s32.totalorder %s17, 1
        %s153 = scalar_select %p152, %s17, 1
        %p154 = scmp.lt.s32.totalorder %s147, 12
        %s155 = scalar_select %p154, %s147, 12
        %s156 = smul.addr %s153, 13
        %s157 = sadd.s32 %s155, %s156
        %s158 = smul.addr %s157, 8
        %s159 = scalar_lea.vmem %s0, %s158
        %p160 = pneg %p48
        %p161 = pneg %p45
        %p162 = pneg %p69
        %p163 = pneg %p66
        %p164 = pneg %p97
        %p165 = pneg %p94
        %s166 = sand.u32 %s84, 1
        %s167 = sand.u32 %s84, 1
        %s168 = smul.addr %s167, 64
        %s169 = scalar_lea.vmem [#allocation2], %s168
        %s170 = smul.u32 8, %s18
        %s171 = ssub.s32 13, %s170
        %p172 = scmp.lt.s32.totalorder %s171, 8
        %s173 = scalar_select %p172, %s171, 8
        %s174 = smul.u32 128, %s173
        %p175 = scmp.lt.s32.totalorder %s17, 1
        %s176 = scalar_select %p175, %s17, 1
        %p177 = scmp.lt.s32.totalorder %s170, 12
        %s178 = scalar_select %p177, %s170, 12
        %s179 = smul.addr %s176, 13
        %s180 = sadd.s32 %s178, %s179
        %s181 = smul.addr %s180, 8
        %s182 = scalar_lea.vmem %s0, %s181
        %s183 = smul.u32 8, %s18
        %s184 = ssub.s32 13, %s183
        %p185 = scmp.lt.s32.totalorder %s184, 8
        %s186 = scalar_select %p185, %s184, 8
        %s187 = smul.u32 128, %s186
        %s188 = smul.u32 8, %s18
        %s189 = ssub.s32 13, %s188
        %p190 = scmp.lt.s32.totalorder %s189, 8
        %s191 = scalar_select %p190, %s189, 8
        %s192 = smul.u32 128, %s191
        %v193 = vld [vmem:[%s182] sm:$0xff]
        %v194 = vld [vmem:[%s182 + $0x8] sm:$0xff]
        %v195 = vld [vmem:[%s182 + $0x10] sm:$0xff]
        %v196 = vld [vmem:[%s182 + $0x18] sm:$0xff]
        %v197 = vld [vmem:[%s182 + $0x20] sm:$0xff]
        %v198 = vld [vmem:[%s182 + $0x28] sm:$0xff]
        %v199 = vld [vmem:[%s182 + $0x30] sm:$0xff]
        %v200 = vld [vmem:[%s182 + $0x38] sm:$0xff]
        %v201 = vmul.f32 %v193, 3.1622777
        %v202 = vmul.f32 %v194, 3.1622777
        %v203 = vmul.f32 %v195, 3.1622777
        %v204 = vmul.f32 %v196, 3.1622777
        %v205 = vmul.f32 %v197, 3.1622777
        %v206 = vmul.f32 %v198, 3.1622777
        %v207 = vmul.f32 %v199, 3.1622777
        %v208 = vmul.f32 %v200, 3.1622777
        %v209 = vld [vmem:[%s1] sm:$0x1]
        %211 = vset.pattern.permute.xlu0 0
        %212 = vperm.xlu0 %211, %v201
        %v213 = vpop.permute.xlu0 %212
        %216 = vset.pattern.permute.xlu0 0
        %217 = vperm.xlu0 %216, %v202
        %v218 = vpop.permute.xlu0 %217
        %221 = vset.pattern.permute.xlu0 0
        %222 = vperm.xlu0 %221, %v203
        %v223 = vpop.permute.xlu0 %222
        %226 = vset.pattern.permute.xlu0 0
        %227 = vperm.xlu0 %226, %v204
        %v228 = vpop.permute.xlu0 %227
        %231 = vset.pattern.permute.xlu0 0
        %232 = vperm.xlu0 %231, %v205
        %v233 = vpop.permute.xlu0 %232
        %236 = vset.pattern.permute.xlu0 0
        %237 = vperm.xlu0 %236, %v206
        %v238 = vpop.permute.xlu0 %237
        %241 = vset.pattern.permute.xlu0 0
        %242 = vperm.xlu0 %241, %v207
        %v243 = vpop.permute.xlu0 %242
        %246 = vset.pattern.permute.xlu0 0
        %247 = vperm.xlu0 %246, %v208
        %v248 = vpop.permute.xlu0 %247
        %v251 = vlaneseq
        %v252 = vshrl.u32 %v251, 7
        %v253 = vsub.s32 0, %v252
        %v254 = vrot.slane %v209, %v253
        %v256 = vsub.f32 %v213, %v254
        %v257 = vsub.f32 %v218, %v254
        %v258 = vsub.f32 %v223, %v254
        %v259 = vsub.f32 %v228, %v254
        %v260 = vsub.f32 %v233, %v254
        %v261 = vsub.f32 %v238, %v254
        %v262 = vsub.f32 %v243, %v254
        %v263 = vsub.f32 %v248, %v254
        %v264 = vmul.f32 %v256, %v256
        %v265 = vmul.f32 %v257, %v257
        %v266 = vmul.f32 %v258, %v258
        %v267 = vmul.f32 %v259, %v259
        %v268 = vmul.f32 %v260, %v260
        %v269 = vmul.f32 %v261, %v261
        %v270 = vmul.f32 %v262, %v262
        %v271 = vmul.f32 %v263, %v263
        %v272 = vsub.f32 0.0, %v264
        %v273 = vsub.f32 0.0, %v265
        %v274 = vsub.f32 0.0, %v266
        %v275 = vsub.f32 0.0, %v267
        %v276 = vsub.f32 0.0, %v268
        %v277 = vsub.f32 0.0, %v269
        %v278 = vsub.f32 0.0, %v270
        %v279 = vsub.f32 0.0, %v271
        %v280 = vmul.f32 %v272, 1.442695
        %v281 = vpow.pop %v280
        %v282 = vmul.f32 %v273, 1.442695
        %v283 = vpow.pop %v282
        %v284 = vmul.f32 %v274, 1.442695
        %v285 = vpow.pop %v284
        %v286 = vmul.f32 %v275, 1.442695
        %v287 = vpow.pop %v286
        %v288 = vmul.f32 %v276, 1.442695
        %v289 = vpow.pop %v288
        %v290 = vmul.f32 %v277, 1.442695
        %v291 = vpow.pop %v290
        %v292 = vmul.f32 %v278, 1.442695
        %v293 = vpow.pop %v292
        %v294 = vmul.f32 %v279, 1.442695
        %v295 = vpow.pop %v294
        %vm296 = vcmask 523264
        %297 = vst.msk [vmem:[%s169] sm:$0xff] %vm296, %v281
        %298 = vst.msk [vmem:[%s169 + $0x8] sm:$0xff] %vm296, %v283
        %299 = vst.msk [vmem:[%s169 + $0x10] sm:$0xff] %vm296, %v285
        %300 = vst.msk [vmem:[%s169 + $0x18] sm:$0xff] %vm296, %v287
        %301 = vst.msk [vmem:[%s169 + $0x20] sm:$0xff] %vm296, %v289
        %302 = vst.msk [vmem:[%s169 + $0x28] sm:$0xff] %vm296, %v291
        %303 = vst.msk [vmem:[%s169 + $0x30] sm:$0xff] %vm296, %v293
        %304 = vst.msk [vmem:[%s169 + $0x38] sm:$0xff] %vm296, %v295
        %s305 = sand.u32 %s84, 1
        %s306 = sand.u32 %s84, 1
        %s307 = smul.addr %s306, 64
        %s308 = scalar_lea.vmem [#allocation2], %s307
        // Predicated region
        $region29: #{tpu_custom_call.1} parent=27 // pred_check
          %p309 = pneg %p94
        $region30: #{tpu_custom_call.1} parent=27 // pred_check_branch
          %311 = sbr.rel (%p309) target = $region32
        $region31: #{tpu_custom_call.1} parent=27 // pred_region
          %s312 = smul.u32 8, %s18
          %s313 = ssub.s32 13, %s312
          %p314 = scmp.lt.s32.totalorder %s313, 8
          %s315 = scalar_select %p314, %s313, 8
          %s316 = smul.u32 128, %s315
          %p317 = scmp.ne.s32.totalorder 0, %s316
          %s318 = smul.addr %s17, 13
          %s319 = sadd.s32 %s312, %s318
          %s320 = smul.addr %s319, 8
          %s321 = scalar_lea.vmem %s2, %s320
          // Predicated region
          $region33: #{tpu_custom_call.1} parent=31 // pred_check
            %p322 = pneg %p317
          $region34: #{tpu_custom_call.1} parent=31 // pred_check_branch
            %324 = sbr.rel (%p322) target = $region36
          $region35: #{tpu_custom_call.1} parent=31 // pred_region
            // Predicated region
            $region37: #{tpu_custom_call.1} parent=35 // pred_check
              _
            $region38: #{tpu_custom_call.1} parent=35 // pred_check_branch
              %326 = sbr.rel (0) target = $region40
            $region39: #{tpu_custom_call.1} parent=35 // pred_region
              // Predicated region
              $region59: #{tpu_custom_call.1} parent=39 // pred_check
                _
              $region60: #{tpu_custom_call.1} parent=39 // pred_check_branch
                %389 = sbr.rel (0) target = $region62
              $region61: #{tpu_custom_call.1} parent=39 // pred_region
                %s390 = sshrl.u32 %s315, 3
                // While loop
                $region63: #{tpu_custom_call.1} parent=61 // loop_pre_header
                  _
                $region64: #{tpu_custom_call.1} parent=61 // loop_header
                  %s392 = sphi 0, %s394
                  %p393 = scmp.ge.s32.totalorder %s392, %s390
                  %s397 = sphi 0, %s418
                  %s398 = sphi %s308, %s421
                  %s399 = sphi %s321, %s422
                $region65: #{tpu_custom_call.1} parent=61 // loop_header_branch
                  %396 = sbr.rel (%p393) target = $region69
                $region66: #{tpu_custom_call.1} parent=61 // loop_body
                  %v400 = vld [vmem:[%s398] sm:$0xff]
                  %401 = vst [vmem:[%s399] sm:$0xff] %v400
                  %v402 = vld [vmem:[%s398 + $0x8] sm:$0xff]
                  %403 = vst [vmem:[%s399 + $0x8] sm:$0xff] %v402
                  %v404 = vld [vmem:[%s398 + $0x10] sm:$0xff]
                  %405 = vst [vmem:[%s399 + $0x10] sm:$0xff] %v404
                  %v406 = vld [vmem:[%s398 + $0x18] sm:$0xff]
                  %407 = vst [vmem:[%s399 + $0x18] sm:$0xff] %v406
                  %v408 = vld [vmem:[%s398 + $0x20] sm:$0xff]
                  %409 = vst [vmem:[%s399 + $0x20] sm:$0xff] %v408
                  %v410 = vld [vmem:[%s398 + $0x28] sm:$0xff]
                  %411 = vst [vmem:[%s399 + $0x28] sm:$0xff] %v410
                  %v412 = vld [vmem:[%s398 + $0x30] sm:$0xff]
                  %413 = vst [vmem:[%s399 + $0x30] sm:$0xff] %v412
                  %v414 = vld [vmem:[%s398 + $0x38] sm:$0xff]
                  %415 = vst [vmem:[%s399 + $0x38] sm:$0xff] %v414
                  %s416 = sadd.s32 1, %s397
                  %p417 = scmp.ge.s32.totalorder %s416, %s390
                  %s418 = scalar_select %p417, 0, %s416
                  %s419 = smul.u32 %s418, 64
                  %s420 = smul.u32 %s418, 64
                  %s421 = scalar_lea.vmem %s308, %s419 [#allocation2]
                  %s422 = scalar_lea.vmem %s321, %s420
                $region67: #{tpu_custom_call.1} parent=61 // loop_footer
                  %s394 = sadd.s32 %s392, 1
                $region68: #{tpu_custom_call.1} parent=61 // loop_footer_branch
                  %391 = sbr.rel target = $region64
                $region69: #{tpu_custom_call.1} parent=61 // loop_exit
                  _
                %s423 = sshrl.u32 %s315, 3
                %s424 = sand.u32 %s315, 7
                %s425 = smul.u32 %s423, 8
                %s426 = smul.u32 8, %s425
                %s427 = scalar_lea.vmem %s308, %s426 [#allocation2]
                %s428 = smul.u32 8, %s425
                %s429 = scalar_lea.vmem %s321, %s428
                // While loop
                $region70: #{tpu_custom_call.1} parent=61 // loop_pre_header
                  _
                $region71: #{tpu_custom_call.1} parent=61 // loop_header
                  %s431 = sphi 0, %s433
                  %p432 = scmp.ge.s32.totalorder %s431, %s424
                  %s436 = sphi 0, %s443
                  %s437 = sphi %s427, %s446
                  %s438 = sphi %s429, %s447
                $region72: #{tpu_custom_call.1} parent=61 // loop_header_branch
                  %435 = sbr.rel (%p432) target = $region76
                $region73: #{tpu_custom_call.1} parent=61 // loop_body
                  %v439 = vld [vmem:[%s437] sm:$0xff]
                  %440 = vst [vmem:[%s438] sm:$0xff] %v439
                  %s441 = sadd.s32 1, %s436
                  %p442 = scmp.ge.s32.totalorder %s441, %s424
                  %s443 = scalar_select %p442, 0, %s441
                  %s444 = smul.u32 %s443, 8
                  %s445 = smul.u32 %s443, 8
                  %s446 = scalar_lea.vmem %s427, %s444 [#allocation2]
                  %s447 = scalar_lea.vmem %s429, %s445
                $region74: #{tpu_custom_call.1} parent=61 // loop_footer
                  %s433 = sadd.s32 %s431, 1
                $region75: #{tpu_custom_call.1} parent=61 // loop_footer_branch
                  %430 = sbr.rel target = $region71
                $region76: #{tpu_custom_call.1} parent=61 // loop_exit
                  _
              $region62: #{tpu_custom_call.1} parent=39 // pred_fallthru
                _
              // Predicated region
              $region77: #{tpu_custom_call.1} parent=39 // pred_check
                _
              $region78: #{tpu_custom_call.1} parent=39 // pred_check_branch
                %449 = sbr.rel target = $region80
              $region79: #{tpu_custom_call.1} parent=39 // pred_region
                _
              $region80: #{tpu_custom_call.1} parent=39 // pred_fallthru
                _
            $region40: #{tpu_custom_call.1} parent=35 // pred_fallthru
              _
            // Predicated region
            $region41: #{tpu_custom_call.1} parent=35 // pred_check
              _
            $region42: #{tpu_custom_call.1} parent=35 // pred_check_branch
              %328 = sbr.rel target = $region44
            $region43: #{tpu_custom_call.1} parent=35 // pred_region
              %s330 = sshrl.u32 %s315, 3
              // While loop
              $region45: #{tpu_custom_call.1} parent=43 // loop_pre_header
                _
              $region46: #{tpu_custom_call.1} parent=43 // loop_header
                %s332 = sphi 0, %s334
                %p333 = scmp.ge.s32.totalorder %s332, %s330
                %s337 = sphi 0, %s358
                %s338 = sphi %s308, %s361
                %s339 = sphi %s321, %s362
              $region47: #{tpu_custom_call.1} parent=43 // loop_header_branch
                %336 = sbr.rel (%p333) target = $region51
              $region48: #{tpu_custom_call.1} parent=43 // loop_body
                %v340 = vld [vmem:[%s338] sm:$0xff]
                %341 = vst [vmem:[%s339] sm:$0xff] %v340
                %v342 = vld [vmem:[%s338 + $0x8] sm:$0xff]
                %343 = vst [vmem:[%s339 + $0x8] sm:$0xff] %v342
                %v344 = vld [vmem:[%s338 + $0x10] sm:$0xff]
                %345 = vst [vmem:[%s339 + $0x10] sm:$0xff] %v344
                %v346 = vld [vmem:[%s338 + $0x18] sm:$0xff]
                %347 = vst [vmem:[%s339 + $0x18] sm:$0xff] %v346
                %v348 = vld [vmem:[%s338 + $0x20] sm:$0xff]
                %349 = vst [vmem:[%s339 + $0x20] sm:$0xff] %v348
                %v350 = vld [vmem:[%s338 + $0x28] sm:$0xff]
                %351 = vst [vmem:[%s339 + $0x28] sm:$0xff] %v350
                %v352 = vld [vmem:[%s338 + $0x30] sm:$0xff]
                %353 = vst [vmem:[%s339 + $0x30] sm:$0xff] %v352
                %v354 = vld [vmem:[%s338 + $0x38] sm:$0xff]
                %355 = vst [vmem:[%s339 + $0x38] sm:$0xff] %v354
                %s356 = sadd.s32 1, %s337
                %p357 = scmp.ge.s32.totalorder %s356, %s330
                %s358 = scalar_select %p357, 0, %s356
                %s359 = smul.u32 %s358, 64
                %s360 = smul.u32 %s358, 64
                %s361 = scalar_lea.vmem %s308, %s359 [#allocation2]
                %s362 = scalar_lea.vmem %s321, %s360
              $region49: #{tpu_custom_call.1} parent=43 // loop_footer
                %s334 = sadd.s32 %s332, 1
              $region50: #{tpu_custom_call.1} parent=43 // loop_footer_branch
                %331 = sbr.rel target = $region46
              $region51: #{tpu_custom_call.1} parent=43 // loop_exit
                _
              %s363 = sshrl.u32 %s315, 3
              %s364 = sand.u32 %s315, 7
              %s365 = smul.u32 %s363, 8
              %s366 = smul.u32 8, %s365
              %s367 = scalar_lea.vmem %s308, %s366 [#allocation2]
              %s368 = smul.u32 8, %s365
              %s369 = scalar_lea.vmem %s321, %s368
              // While loop
              $region52: #{tpu_custom_call.1} parent=43 // loop_pre_header
                _
              $region53: #{tpu_custom_call.1} parent=43 // loop_header
                %s371 = sphi 0, %s373
                %p372 = scmp.ge.s32.totalorder %s371, %s364
                %s376 = sphi 0, %s383
                %s377 = sphi %s367, %s386
                %s378 = sphi %s369, %s387
              $region54: #{tpu_custom_call.1} parent=43 // loop_header_branch
                %375 = sbr.rel (%p372) target = $region58
              $region55: #{tpu_custom_call.1} parent=43 // loop_body
                %v379 = vld [vmem:[%s377] sm:$0xff]
                %380 = vst [vmem:[%s378] sm:$0xff] %v379
                %s381 = sadd.s32 1, %s376
                %p382 = scmp.ge.s32.totalorder %s381, %s364
                %s383 = scalar_select %p382, 0, %s381
                %s384 = smul.u32 %s383, 8
                %s385 = smul.u32 %s383, 8
                %s386 = scalar_lea.vmem %s367, %s384 [#allocation2]
                %s387 = scalar_lea.vmem %s369, %s385
              $region56: #{tpu_custom_call.1} parent=43 // loop_footer
                %s373 = sadd.s32 %s371, 1
              $region57: #{tpu_custom_call.1} parent=43 // loop_footer_branch
                %370 = sbr.rel target = $region53
              $region58: #{tpu_custom_call.1} parent=43 // loop_exit
                _
            $region44: #{tpu_custom_call.1} parent=35 // pred_fallthru
              _
          $region36: #{tpu_custom_call.1} parent=31 // pred_fallthru
            _
          %450 = vnop
        $region32: #{tpu_custom_call.1} parent=27 // pred_fallthru
          _
      $region28: #{tpu_custom_call.1} parent=5 // pred_fallthru
        _
      %p451 = scmp.le.s32.totalorder 2, %s8
      // Predicated region
      $region81: #{tpu_custom_call.1} parent=5 // pred_check
        %p452 = pneg %p451
      $region82: #{tpu_custom_call.1} parent=5 // pred_check_branch
        %454 = sbr.rel (%p452) target = $region84
      $region83: #{tpu_custom_call.1} parent=5 // pred_region
        %s455 = ssub.s32 %s8, 2
        // Predicated region
        $region85: #{tpu_custom_call.1} parent=83 // pred_check
          %p456 = pneg %p100
        $region86: #{tpu_custom_call.1} parent=83 // pred_check_branch
          %458 = sbr.rel (%p456) target = $region88
        $region87: #{tpu_custom_call.1} parent=83 // pred_region
          %s459 = sand.u32 %s85, 1
          %s460 = sand.u32 %s85, 1
          %s461 = smul.addr %s460, 64
          %s462 = scalar_lea.vmem [#allocation2], %s461
        $region88: #{tpu_custom_call.1} parent=83 // pred_fallthru
          _
      $region84: #{tpu_custom_call.1} parent=5 // pred_fallthru
        _
    $region6: #{tpu_custom_call.1} parent=1 // loop_footer
      %s12 = sadd.s32 1, %s8
    $region7: #{tpu_custom_call.1} parent=1 // loop_footer_branch
      %7 = sbr.rel target = $region3
    $region8: #{tpu_custom_call.1} parent=1 // loop_exit
      _

</llo_original>
